<compile_context>
chip_gen: v7x
topology: tpu7x:2x2x1
jax: 0.10.0
libtpu: 0.0.40
codegen_flags: <defaults>
</compile_context>

<pallas_src>
import jax
import jax.numpy as jnp
from jax.experimental import pallas as pl
from jax.experimental.pallas import tpu as pltpu

EPS = 1e-5  # PyTorch F.layer_norm default


def _layernorm_kernel(x_ref, g_ref, b_ref, o_ref):
    # x_ref: (TR, H), g_ref/b_ref: (1, H), o_ref: (TR, H)
    x = x_ref[...].astype(jnp.float32)
    gamma = g_ref[...].astype(jnp.float32)
    beta = b_ref[...].astype(jnp.float32)

    mean = jnp.mean(x, axis=-1, keepdims=True)                    # (TR, 1)
    centered = x - mean
    var = jnp.mean(centered * centered, axis=-1, keepdims=True)   # biased variance
    inv = jax.lax.rsqrt(var + EPS)                                # (TR, 1)

    # Folded affine epilogue: y = centered * (inv * gamma) + beta
    scale = inv * gamma                                           # (TR, H)
    o_ref[...] = (centered * scale + beta).astype(o_ref.dtype)


def _round_up(a, b):
    return ((a + b - 1) // b) * b


def _vmem_budget_bytes():
    """Scoped-VMEM limit to request from the compiler, per chip generation.

    v5e/v6e have 128 MiB VMEM per TensorCore, v7x only 64 MiB; the scoped
    default (16/32 MiB) would otherwise cap our tile size, so raise it
    explicitly while leaving headroom for compiler scratch.
    """
    cap = 64 * 1024 * 1024  # conservative fallback (v7x per-TC VMEM)
    try:
        info = pltpu.get_tpu_info()
        cap = int(getattr(info, "vmem_capacity_bytes", cap))
    except Exception:
        pass
    return max(32 * 1024 * 1024, min((cap * 3) // 4, 96 * 1024 * 1024))


def layer_norm(x, gamma, beta):
    """x: [..., H]; gamma/beta: [H]. Returns same shape/dtype as x."""
    orig_shape = x.shape
    H = orig_shape[-1]
    rows = 1
    for d in orig_shape[:-1]:
        rows *= d

    x2 = x.reshape(rows, H)
    g2 = gamma.reshape(1, H)
    b2 = beta.reshape(1, H)

    itemsize = jnp.dtype(x.dtype).itemsize
    # Sublane quantum for the second-minor dim: 8 for f32, 16 for bf16, 32 for int8.
    q = max(8, 32 // max(itemsize, 1))

    vmem_limit = _vmem_budget_bytes()

    # Per-row VMEM bytes: double-buffered input + double-buffered output tiles
    # (input dtype) plus ~3 f32 full-tile intermediates inside the kernel
    # (x upcast, centered, scale).  Use ~60% of the scoped limit for this.
    per_row_bytes = H * (4 * itemsize + 3 * 4)
    target_tr = (vmem_limit * 6 // 10) // max(per_row_bytes, 1)

    # Big tiles (hundreds of rows), never below the sublane quantum, never
    # bigger than the (quantum-rounded) row count, always a multiple of q.
    tr = int(min(1024, max(q, target_tr)))
    tr = max(q, (tr // q) * q)
    tr = min(tr, _round_up(max(rows, 1), q))

    rows_pad = _round_up(max(rows, 1), tr)
    if rows_pad > rows:
        x2 = jnp.pad(x2, ((0, rows_pad - rows), (0, 0)))

    grid = (rows_pad // tr,)

    out = pl.pallas_call(
        _layernorm_kernel,
        out_shape=jax.ShapeDtypeStruct((rows_pad, H), x.dtype),
        grid_spec=pltpu.PrefetchScalarGridSpec(
            num_scalar_prefetch=0,
            grid=grid,
            in_specs=[
                pl.BlockSpec((tr, H), lambda i: (i, 0)),
                pl.BlockSpec((1, H), lambda i: (0, 0)),
                pl.BlockSpec((1, H), lambda i: (0, 0)),
            ],
            out_specs=pl.BlockSpec((tr, H), lambda i: (i, 0)),
        ),
        compiler_params=pltpu.CompilerParams(
            # Single row axis is fully parallel -> megacore-shardable on v7x.
            dimension_semantics=("parallel",),
            vmem_limit_bytes=vmem_limit,
        ),
    )(x2, g2, b2)

    if rows_pad > rows:
        out = out[:rows]
    return out.reshape(orig_shape)


if __name__ == "__main__":
    # Module: LayerNorm(dim=hidden, scale=True)
    #   learned_gamma = ones(dim) (parameter), beta = zeros(dim) (buffer).
    # hidden chosen as 128 so the output last dim is lane-dense (multiple of 128).
    batch, seq, hidden = 2, 8, 128

    key = jax.random.PRNGKey(0)
    x = jax.random.normal(key, (batch, seq, hidden), dtype=jnp.float32)

    # Deterministic parameter init matching nn.Module __init__.
    gamma = jnp.ones((hidden,), dtype=jnp.float32)
    beta = jnp.zeros((hidden,), dtype=jnp.float32)

    y = layer_norm(x, gamma, beta)
    jax.block_until_ready(y)

    # Reference check (plain JAX) to validate semantics.
    mean = jnp.mean(x, axis=-1, keepdims=True)
    var = jnp.mean((x - mean) ** 2, axis=-1, keepdims=True)
    ref = (x - mean) * jax.lax.rsqrt(var + EPS) * gamma + beta
    assert jnp.allclose(y, ref, atol=1e-5, rtol=1e-5), "mismatch vs reference"

    # Also exercise a non-tile-aligned row count (padding path).
    x2 = jax.random.normal(jax.random.PRNGKey(1), (3, 5, hidden), dtype=jnp.float32)
    y2 = layer_norm(x2, gamma, beta)
    jax.block_until_ready(y2)
    mean2 = jnp.mean(x2, axis=-1, keepdims=True)
    var2 = jnp.mean((x2 - mean2) ** 2, axis=-1, keepdims=True)
    ref2 = (x2 - mean2) * jax.lax.rsqrt(var2 + EPS) * gamma + beta
    assert jnp.allclose(y2, ref2, atol=1e-5, rtol=1e-5), "mismatch vs reference (padded path)"

    print("KERNEL_OK")
</pallas_src>

<mosaic_0001>
module attributes {stable_mosaic.version = 11 : i64} {
  func.func @_layernorm_kernel(%arg0: i32, %arg1: memref<16x128xf32, #tpu.memory_space<vmem>>, %arg2: memref<1x128xf32, #tpu.memory_space<vmem>>, %arg3: memref<1x128xf32, #tpu.memory_space<vmem>>, %arg4: memref<16x128xf32, #tpu.memory_space<vmem>>) attributes {dimension_semantics = [#tpu.dimension_semantics<parallel>], iteration_bounds = array<i64: 1>, scalar_prefetch = 0 : i64, scratch_operands = 0 : i64, tpu.core_type = #tpu.core_type<tc>, window_params = [{transform_indices = @transform_0, window_bounds = array<i64: 16, 128>}, {pipeline_mode = #tpu.pipeline_mode<synchronous>, transform_indices = @transform_1, window_bounds = array<i64: 1, 128>}, {pipeline_mode = #tpu.pipeline_mode<synchronous>, transform_indices = @transform_2, window_bounds = array<i64: 1, 128>}, {transform_indices = @transform_3, window_bounds = array<i64: 16, 128>}]} {
    %c0 = arith.constant 0 : index
    %c0_0 = arith.constant 0 : index
    %0 = vector.load %arg1[%c0, %c0_0] : memref<16x128xf32, #tpu.memory_space<vmem>>, vector<16x128xf32>
    %c0_1 = arith.constant 0 : index
    %c0_2 = arith.constant 0 : index
    %1 = vector.load %arg2[%c0_1, %c0_2] : memref<1x128xf32, #tpu.memory_space<vmem>>, vector<1x128xf32>
    %c0_3 = arith.constant 0 : index
    %c0_4 = arith.constant 0 : index
    %2 = vector.load %arg3[%c0_3, %c0_4] : memref<1x128xf32, #tpu.memory_space<vmem>>, vector<1x128xf32>
    %cst = arith.constant dense<0.000000e+00> : vector<16xf32>
    %3 = vector.multi_reduction <add>, %0, %cst [1] : vector<16x128xf32> to vector<16xf32>
    %4 = vector.shape_cast %3 : vector<16xf32> to vector<16x1xf32>
    %cst_5 = arith.constant 1.280000e+02 : f32
    %5 = vector.broadcast %cst_5 : f32 to vector<16x1xf32>
    %6 = arith.divf %4, %5 : vector<16x1xf32>
    %7 = vector.broadcast %6 : vector<16x1xf32> to vector<16x128xf32>
    %8 = arith.subf %0, %7 : vector<16x128xf32>
    %9 = arith.mulf %8, %8 : vector<16x128xf32>
    %cst_6 = arith.constant dense<0.000000e+00> : vector<16xf32>
    %10 = vector.multi_reduction <add>, %9, %cst_6 [1] : vector<16x128xf32> to vector<16xf32>
    %11 = vector.shape_cast %10 : vector<16xf32> to vector<16x1xf32>
    %cst_7 = arith.constant 1.280000e+02 : f32
    %12 = vector.broadcast %cst_7 : f32 to vector<16x1xf32>
    %13 = arith.divf %11, %12 : vector<16x1xf32>
    %cst_8 = arith.constant 9.99999974E-6 : f32
    %14 = vector.broadcast %cst_8 : f32 to vector<16x1xf32>
    %15 = arith.addf %13, %14 : vector<16x1xf32>
    %16 = math.rsqrt %15 : vector<16x1xf32>
    %17 = vector.broadcast %16 : vector<16x1xf32> to vector<16x128xf32>
    %18 = vector.broadcast %1 : vector<1x128xf32> to vector<16x128xf32>
    %19 = arith.mulf %17, %18 : vector<16x128xf32>
    %20 = arith.mulf %8, %19 : vector<16x128xf32>
    %21 = vector.broadcast %2 : vector<1x128xf32> to vector<16x128xf32>
    %22 = arith.addf %20, %21 : vector<16x128xf32>
    %c0_9 = arith.constant 0 : index
    %c0_10 = arith.constant 0 : index
    %23 = vector.load %arg4[%c0_9, %c0_10] : memref<16x128xf32, #tpu.memory_space<vmem>>, vector<16x128xf32>
    tpu.vector_store %arg4[%c0_9, %c0_10], %22 {strides = array<i32>} : memref<16x128xf32, #tpu.memory_space<vmem>>, vector<16x128xf32>,
    return
  }
  func.func @transform_0(%arg0: i32) -> (i32, i32) {
    %c0_i32 = arith.constant 0 : i32
    %c0_i32_0 = arith.constant 0 : i32
    return %arg0, %c0_i32 : i32, i32
  }
  func.func @transform_1(%arg0: i32) -> (i32, i32) {
    %c0_i32 = arith.constant 0 : i32
    %c0_i32_0 = arith.constant 0 : i32
    %c0_i32_1 = arith.constant 0 : i32
    return %c0_i32, %c0_i32_0 : i32, i32
  }
  func.func @transform_2(%arg0: i32) -> (i32, i32) {
    %c0_i32 = arith.constant 0 : i32
    %c0_i32_0 = arith.constant 0 : i32
    %c0_i32_1 = arith.constant 0 : i32
    return %c0_i32, %c0_i32_0 : i32, i32
  }
  func.func @transform_3(%arg0: i32) -> (i32, i32) {
    %c0_i32 = arith.constant 0 : i32
    %c0_i32_0 = arith.constant 0 : i32
    return %arg0, %c0_i32 : i32, i32
  }
}

</mosaic_0001>

<llo_original>
// kernel: tpu_custom_call.1
$region0: #{tpu_custom_call.1}
  #allocation0 [shape = 'u32[]', space=smem, size = 0x4, offset = 0x4, fixed_abs, tag = 'smem constant byte address 0x4 - core index']
  #allocation1 [shape = 'u32[144,128]{1,0:T(1,128)}', space=vmem, size = 0x12000, scoped, tag = 'internal scratch']
  %s0 = inlined_call_operand.hbm [shape: f32[16,128], index: 0, kind: input, shape index: {}]
  %s1 = inlined_call_operand.vmem [shape: f32[1,128], index: 1, kind: input, shape index: {}]
  %s2 = inlined_call_operand.vmem [shape: f32[1,128], index: 2, kind: input, shape index: {}]
  %s3 = inlined_call_operand.hbm [shape: f32[16,128], index: 3, kind: output, shape index: {}]
  %s4 = sld [smem:[#allocation0]]
  $region26: #{tpu_custom_call.1} parent=0
    _
  %s6 = ssub.s32 1, %s4
  %s7 = scalar_select 0, %s6, %s4
  $region1: #{tpu_custom_call.1} parent=0
    #allocation2 [shape = 'u8[8192]{0}', space=vmem, size = 0x2000, scoped, tag = 'input window, operand 0, single buffered']
    #allocation3 [shape = 's32[1]{0}', space=sflag, size = 0x4, scoped, tag = 'scoped memory for tpu_custom_call.1']
    #allocation4 [shape = 's32[1]{0}', space=sflag, size = 0x4, scoped, tag = 'scoped memory for tpu_custom_call.1']
    #allocation5 [shape = 'u8[8192]{0}', space=vmem, size = 0x2000, scoped, tag = 'output window, operand 0, single buffered']
    %8 = vsyncpa [#allocation3], 0
    %9 = vsyncpa [#allocation4], 0
    // Predicated region
    $region2: #{tpu_custom_call.1} parent=1 // pred_check
      _
    $region3: #{tpu_custom_call.1} parent=1 // pred_check_branch
      %11 = sbr.rel (0) target = $region5
    $region4: #{tpu_custom_call.1} parent=1 // pred_region
      %s13 = ssub.s32 256, 256
      %14 = vsyncadd [#allocation3], %s13
      %s15 = sshll.u32 [#allocation2], 4
      %s16 = int_to_ptr.vmem [resolvable:$true] %s15
      %21 = dma.hbm_to_vmem [thread:$0]  %s0, 256, %s16, [#allocation3], 128, 128, 8
    $region5: #{tpu_custom_call.1} parent=1 // pred_fallthru
      _
    // Predicated region
    $region6: #{tpu_custom_call.1} parent=1 // pred_check
      _
    $region7: #{tpu_custom_call.1} parent=1 // pred_check_branch
      %23 = sbr.rel (0) target = $region9
    $region8: #{tpu_custom_call.1} parent=1 // pred_region
      _
    $region9: #{tpu_custom_call.1} parent=1 // pred_fallthru
      _
    // Predicated region
    $region10: #{tpu_custom_call.1} parent=1 // pred_check
      _
    $region11: #{tpu_custom_call.1} parent=1 // pred_check_branch
      %25 = sbr.rel (0) target = $region13
    $region12: #{tpu_custom_call.1} parent=1 // pred_region
      _
    $region13: #{tpu_custom_call.1} parent=1 // pred_fallthru
      _
    // Predicated region
    $region14: #{tpu_custom_call.1} parent=1 // pred_check
      _
    $region15: #{tpu_custom_call.1} parent=1 // pred_check_branch
      %27 = sbr.rel (0) target = $region17
    $region16: #{tpu_custom_call.1} parent=1 // pred_region
      %28 = dma.done [#allocation3], 256
    $region17: #{tpu_custom_call.1} parent=1 // pred_fallthru
      _
    %v29 = vld [vmem:[#allocation2] sm:$0xff]
    %v30 = vld [vmem:[#allocation2 + $0x8] sm:$0xff]
    %v31 = vld [vmem:[%s1] sm:$0x1]
    %v32 = vld [vmem:[%s2] sm:$0x1]
    %33 = vadd.xlane.f32.xlu0 %v29
    %v34 = vpop.xlane.xlu0 %33
    %35 = vadd.xlane.f32.xlu0 %v30
    %v36 = vpop.xlane.xlu0 %35
    %v37 = vrcp.pop 128.0
    %v38 = vmul.f32 %v34, %v37
    %v39 = vmul.f32 %v36, %v37
    %v40 = vsub.f32 %v29, %v38
    %v41 = vsub.f32 %v30, %v39
    %v42 = vmul.f32 %v40, %v40
    %v43 = vmul.f32 %v41, %v41
    %44 = vadd.xlane.f32.xlu0 %v42
    %v45 = vpop.xlane.xlu0 %44
    %46 = vadd.xlane.f32.xlu0 %v43
    %v47 = vpop.xlane.xlu0 %46
    %v48 = vmul.f32 %v45, %v37
    %v49 = vmul.f32 %v47, %v37
    %v50 = vadd.f32 %v48, 1e-05
    %v51 = vadd.f32 %v49, 1e-05
    %v52 = vrsqrt.pop %v50
    %v53 = vrsqrt.pop %v51
    %v55 = vlaneseq
    %v56 = vshrl.u32 %v55, 7
    %v57 = vsub.s32 0, %v56
    %v58 = vrot.slane %v31, %v57
    %v60 = vmul.f32 %v52, %v58
    %v61 = vmul.f32 %v53, %v58
    %v62 = vmul.f32 %v40, %v60
    %v63 = vmul.f32 %v41, %v61
    %v65 = vlaneseq
    %v66 = vshrl.u32 %v65, 7
    %v67 = vsub.s32 0, %v66
    %v68 = vrot.slane %v32, %v67
    %v70 = vadd.f32 %v62, %v68
    %v71 = vadd.f32 %v63, %v68
    %72 = vst [vmem:[#allocation5] sm:$0xff] %v70
    %73 = vst [vmem:[#allocation5 + $0x8] sm:$0xff] %v71
    // Predicated region
    $region18: #{tpu_custom_call.1} parent=1 // pred_check
      _
    $region19: #{tpu_custom_call.1} parent=1 // pred_check_branch
      %75 = sbr.rel (0) target = $region21
    $region20: #{tpu_custom_call.1} parent=1 // pred_region
      %s77 = ssub.s32 256, 256
      %78 = vsyncadd [#allocation4], %s77
      %s79 = sshll.u32 [#allocation5], 4
      %s80 = int_to_ptr.vmem [resolvable:$true] %s79
      %85 = dma.vmem_to_hbm [thread:$0]  %s80, 256, %s3, [#allocation4], 128, 128, 8
    $region21: #{tpu_custom_call.1} parent=1 // pred_fallthru
      _
    // Predicated region
    $region22: #{tpu_custom_call.1} parent=1 // pred_check
      _
    $region23: #{tpu_custom_call.1} parent=1 // pred_check_branch
      %87 = sbr.rel (0) target = $region25
    $region24: #{tpu_custom_call.1} parent=1 // pred_region
      %88 = dma.done [#allocation4], 256
    $region25: #{tpu_custom_call.1} parent=1 // pred_fallthru
      _
    %89 = vsyncpa [#allocation3], 1
    %90 = vsyncpa [#allocation4], 1

</llo_original>
